<compile_context>
chip_gen: v5e
topology: v5e:2x2
jax: 0.10.0
libtpu: 0.0.40
codegen_flags: <defaults>
</compile_context>

<pallas_src>
from functools import partial
import math

import jax
import jax.numpy as jnp
from jax.experimental import pallas as pl
from jax.experimental.pallas import tpu as pltpu


# ---------------------------------------------------------------------------
# GELU (tanh approximation)
# ---------------------------------------------------------------------------
# TODO(synk): torch's nn.GELU() default is the exact erf-based GELU; erf has
# no guaranteed Mosaic lowering, so the tanh approximation is used here
# (max abs deviation ~1e-3 from exact).  The in-script reference matches it.
_GELU_C = math.sqrt(2.0 / math.pi)


def _gelu_tanh(x):
    return 0.5 * x * (1.0 + jnp.tanh(_GELU_C * (x + 0.044715 * x * x * x)))


# ---------------------------------------------------------------------------
# Small helpers
# ---------------------------------------------------------------------------
def _round_up(x: int, m: int) -> int:
    return ((x + m - 1) // m) * m


def _vmem_limit_bytes() -> int:
    """Generation-aware scoped-VMEM limit (~3/4 of physical, capped)."""
    try:
        cap = pltpu.get_tpu_info().vmem_capacity_bytes
        return min(int(cap * 3 // 4), 96 * 1024 * 1024)
    except Exception:
        return 48 * 1024 * 1024   # safe on v5e / v6e / v7x


def _choose_row_tile(m_rows: int, pref: int, align: int) -> int:
    """Row tile <= pref, `align`-aligned; prefers >=2 row blocks (v7x megacore)."""
    if m_rows <= 2 * align:
        return _round_up(m_rows, align)
    tm = min(pref, _round_up(m_rows, align))
    if _round_up(m_rows, tm) // tm < 2:
        tm = _round_up((m_rows + 1) // 2, align)
    return tm


def _fused_vmem_estimate(tm, kp, th, np_, in_bytes, out_bytes=4):
    """Double-buffered inputs/output + live f32 hidden slab, in bytes."""
    return (2 * tm * kp * in_bytes          # x tile
            + 2 * kp * th * in_bytes        # W1 tile
            + 2 * th * np_ * in_bytes       # W2 tile
            + 2 * (th + np_) * 4            # biases
            + 2 * tm * np_ * out_bytes      # output tile (accumulator)
            + tm * th * 4)                  # f32 hidden slab inside kernel


# ---------------------------------------------------------------------------
# Fused fc1 + GELU + fc2 kernel
#   grid = (M_blocks, H_blocks);  hidden axis (j) is the reduction.
#   o_ref is resident across j and serves as the f32 accumulator.
# ---------------------------------------------------------------------------
def _fused_mlp_kernel(x_ref, w1_ref, b1_ref, w2_ref, b2_ref, o_ref):
    j = pl.program_id(1)

    @pl.when(j == 0)
    def _init():
        # Initialize the accumulator with the (broadcast) fc2 bias.
        o_ref[...] = jnp.broadcast_to(
            b2_ref[...].astype(o_ref.dtype), o_ref.shape)

    # fc1 slice: (tm, K) @ (K, th) -> f32, + bias, GELU  (stays in VMEM/vregs)
    h = jnp.dot(x_ref[...], w1_ref[...], preferred_element_type=jnp.float32)
    h = _gelu_tanh(h + b1_ref[...].astype(jnp.float32))

    # fc2 partial: (tm, th) @ (th, Nout), accumulated in f32 into the output.
    o_ref[...] += jnp.dot(h.astype(x_ref.dtype), w2_ref[...],
                          preferred_element_type=jnp.float32)


def _fused_mlp(x2d, w1, b1, w2, b2, *, compute_dtype, tm_pref, th_pref):
    """y = (gelu(x2d @ w1 + b1)) @ w2 + b2, one pallas_call, f32 output."""
    M, K = x2d.shape
    K1, H = w1.shape
    H2, Nout = w2.shape
    assert K == K1 and H == H2

    in_bytes = jnp.dtype(compute_dtype).itemsize
    row_align = 16 if in_bytes < 4 else 8

    # --- tile plan (padded, lane/sublane aligned) ---------------------------
    Kp = _round_up(K, 128)
    Np = _round_up(Nout, 128)
    th = min(th_pref, _round_up(H, 128))
    tm = _choose_row_tile(M, tm_pref, row_align)

    limit = _vmem_limit_bytes()
    budget = int(limit * 0.7)
    while _fused_vmem_estimate(tm, Kp, th, Np, in_bytes) > budget:
        if tm > 8 * row_align:
            tm = _round_up(tm // 2, row_align)
        elif th > 256:
            th = _round_up(th // 2, 128)
        else:
            break

    Mp = _round_up(M, tm)
    Hp = _round_up(H, th)
    grid = (Mp // tm, Hp // th)

    # --- zero-pad ragged dims (zeros are exactly neutral: gelu(0)=0) --------
    xp = x2d.astype(compute_dtype)
    if (Mp, Kp) != (M, K):
        xp = jnp.pad(xp, ((0, Mp - M), (0, Kp - K)))
    w1p = w1.astype(compute_dtype)
    if (Kp, Hp) != (K, H):
        w1p = jnp.pad(w1p, ((0, Kp - K), (0, Hp - H)))
    w2p = w2.astype(compute_dtype)
    if (Hp, Np) != (H, Nout):
        w2p = jnp.pad(w2p, ((0, Hp - H), (0, Np - Nout)))
    b1p = jnp.pad(b1.astype(jnp.float32), (0, Hp - H)).reshape(1, Hp)
    b2p = jnp.pad(b2.astype(jnp.float32), (0, Np - Nout)).reshape(1, Np)

    cost = pl.CostEstimate(
        flops=int(2 * Mp * Kp * Hp + 2 * Mp * Hp * Np),
        transcendentals=int(Mp * Hp),
        bytes_accessed=int(xp.size * in_bytes + w1p.size * in_bytes
                           + w2p.size * in_bytes + (Hp + Np) * 4
                           + Mp * Np * 4),
    )

    # NOTE: if the hidden reduction is very short (Hp//th <= 2) and profiling
    # shows exposed DMA, add pipeline_mode=pl.Buffered(3) to the W specs.
    yp = pl.pallas_call(
        _fused_mlp_kernel,
        out_shape=jax.ShapeDtypeStruct((Mp, Np), jnp.float32),
        grid_spec=pltpu.PrefetchScalarGridSpec(
            num_scalar_prefetch=0,
            grid=grid,
            in_specs=[
                pl.BlockSpec((tm, Kp), lambda i, j: (i, 0)),   # x rows
                pl.BlockSpec((Kp, th), lambda i, j: (0, j)),   # W1 slice
                pl.BlockSpec((1, th),  lambda i, j: (0, j)),   # b1 slice
                pl.BlockSpec((th, Np), lambda i, j: (j, 0)),   # W2 slice
                pl.BlockSpec((1, Np),  lambda i, j: (0, 0)),   # b2
            ],
            out_specs=pl.BlockSpec((tm, Np), lambda i, j: (i, 0)),
        ),
        compiler_params=pltpu.CompilerParams(
            dimension_semantics=("parallel", "arbitrary"),
            vmem_limit_bytes=limit,
        ),
        cost_estimate=cost,
    )(xp, w1p, b1p, w2p, b2p)

    return yp[:M, :Nout]


# ---------------------------------------------------------------------------
# Parameter prep (done ONCE, outside the forward): transpose torch's
# (out, in) Linear weights to (in, out) and cast to the MXU feed dtype.
# ---------------------------------------------------------------------------
def prepare_params(torch_params, compute_dtype=jnp.bfloat16):
    return {
        "w1": jnp.asarray(torch_params["w_fc1"]).T.astype(compute_dtype),
        "b1": jnp.asarray(torch_params["b_fc1"]).astype(jnp.float32),
        "w2": jnp.asarray(torch_params["w_fc2"]).T.astype(compute_dtype),
        "b2": jnp.asarray(torch_params["b_fc2"]).astype(jnp.float32),
    }


# ---------------------------------------------------------------------------
# Mlp forward (matches the PyTorch module's forward)
# ---------------------------------------------------------------------------
@partial(jax.jit, static_argnames=("compute_dtype", "tm_pref", "th_pref"))
def mlp_forward(x, params, *, compute_dtype=jnp.bfloat16,
                tm_pref=512, th_pref=512):
    """x: (..., in_features) -> (..., out_features).  Output in float32."""
    *lead, in_features = x.shape
    x2d = x.reshape(-1, in_features)

    # self.drop = nn.Dropout(p=0.0) -> identity (module default / eval mode).
    # TODO(synk): training-mode dropout (p > 0) not implemented; would use
    # pltpu.prng_seed / pltpu.prng_random_bits in the kernel epilogue.
    y2d = _fused_mlp(x2d, params["w1"], params["b1"],
                     params["w2"], params["b2"],
                     compute_dtype=compute_dtype,
                     tm_pref=tm_pref, th_pref=th_pref)

    out_features = params["w2"].shape[1]
    return y2d.reshape(*lead, out_features)


# ---------------------------------------------------------------------------
# Pure-JAX reference (same tanh-GELU as the kernel), torch-style params
# ---------------------------------------------------------------------------
def mlp_ref(x, torch_params):
    hp = jax.lax.Precision.HIGHEST
    h = jnp.matmul(x, torch_params["w_fc1"].T, precision=hp) + torch_params["b_fc1"]
    h = _gelu_tanh(h)
    return jnp.matmul(h, torch_params["w_fc2"].T, precision=hp) + torch_params["b_fc2"]


# ---------------------------------------------------------------------------
# Main
# ---------------------------------------------------------------------------
if __name__ == "__main__":
    # Small but deliberately ragged shapes: tokens=100 (ragged M) and
    # hidden=200 (ragged hidden) exercise the padding / tiling paths.
    B, T = 2, 100
    in_features = 128
    hidden_features = 200

    key = jax.random.PRNGKey(0)
    kx, kw1, kb1, kw2, kb2 = jax.random.split(key, 5)

    x = jax.random.normal(kx, (B, T, in_features), dtype=jnp.float32)

    # torch nn.Linear stores W as (out_features, in_features).
    torch_params = {
        "w_fc1": jax.random.normal(
            kw1, (hidden_features, in_features), jnp.float32) * 0.05,
        "b_fc1": jax.random.normal(kb1, (hidden_features,), jnp.float32) * 0.05,
        "w_fc2": jax.random.normal(
            kw2, (in_features, hidden_features), jnp.float32) * 0.05,
        "b_fc2": jax.random.normal(kb2, (in_features,), jnp.float32) * 0.05,
    }

    # Default path: bf16 MXU feed, f32 accumulation / bias / GELU epilogue.
    params_bf16 = prepare_params(torch_params, compute_dtype=jnp.bfloat16)
    y_bf16 = mlp_forward(x, params_bf16, compute_dtype=jnp.bfloat16)

    # Debug/reference path: f32 feed end-to-end.
    params_f32 = prepare_params(torch_params, compute_dtype=jnp.float32)
    y_f32 = mlp_forward(x, params_f32, compute_dtype=jnp.float32)

    jax.block_until_ready((y_bf16, y_f32))

    y_ref = mlp_ref(x, torch_params)
    assert y_bf16.shape == (B, T, in_features)
    assert y_f32.shape == (B, T, in_features)

    err_f32 = float(jnp.max(jnp.abs(y_f32 - y_ref)))
    assert jnp.allclose(y_f32, y_ref, atol=1e-4, rtol=1e-4), err_f32

    err_bf16 = float(jnp.max(jnp.abs(y_bf16 - y_ref)))
    assert jnp.allclose(y_bf16, y_ref, atol=3e-2, rtol=3e-2), err_bf16

    print("KERNEL_OK")
</pallas_src>

<mosaic_0001>
module attributes {stable_mosaic.version = 11 : i64} {
  func.func @_fused_mlp_kernel(%arg0: i32, %arg1: i32, %arg2: memref<112x128xbf16, #tpu.memory_space<vmem>>, %arg3: memref<128x256xbf16, #tpu.memory_space<vmem>>, %arg4: memref<1x256xf32, #tpu.memory_space<vmem>>, %arg5: memref<256x128xbf16, #tpu.memory_space<vmem>>, %arg6: memref<1x128xf32, #tpu.memory_space<vmem>>, %arg7: memref<112x128xf32, #tpu.memory_space<vmem>>) attributes {dimension_semantics = [#tpu.dimension_semantics<parallel>, #tpu.dimension_semantics<arbitrary>], iteration_bounds = array<i64: 2, 1>, scalar_prefetch = 0 : i64, scratch_operands = 0 : i64, tpu.core_type = #tpu.core_type<tc>, window_params = [{transform_indices = @transform_0, window_bounds = array<i64: 112, 128>}, {transform_indices = @transform_1, window_bounds = array<i64: 128, 256>}, {transform_indices = @transform_2, window_bounds = array<i64: 1, 256>}, {transform_indices = @transform_3, window_bounds = array<i64: 256, 128>}, {pipeline_mode = #tpu.pipeline_mode<synchronous>, transform_indices = @transform_4, window_bounds = array<i64: 1, 128>}, {transform_indices = @transform_5, window_bounds = array<i64: 112, 128>}]} {
    %c0_i32 = arith.constant 0 : i32
    %0 = arith.cmpi eq, %arg1, %c0_i32 : i32
    %1 = arith.extui %0 : i1 to i32
    %c0_i32_0 = arith.constant 0 : i32
    %2 = arith.cmpi ne, %1, %c0_i32_0 : i32
    scf.if %2 {
      %c0_17 = arith.constant 0 : index
      %c0_18 = arith.constant 0 : index
      %28 = vector.load %arg6[%c0_17, %c0_18] : memref<1x128xf32, #tpu.memory_space<vmem>>, vector<1x128xf32>
      %29 = vector.shape_cast %28 : vector<1x128xf32> to vector<1x128xf32>
      %30 = vector.broadcast %29 : vector<1x128xf32> to vector<112x128xf32>
      %c0_19 = arith.constant 0 : index
      %c0_20 = arith.constant 0 : index
      %31 = vector.load %arg7[%c0_19, %c0_20] : memref<112x128xf32, #tpu.memory_space<vmem>>, vector<112x128xf32>
      tpu.vector_store %arg7[%c0_19, %c0_20], %30 {strides = array<i32>} : memref<112x128xf32, #tpu.memory_space<vmem>>, vector<112x128xf32>,
    } else {
    }
    %c0 = arith.constant 0 : index
    %c0_1 = arith.constant 0 : index
    %3 = vector.load %arg2[%c0, %c0_1] : memref<112x128xbf16, #tpu.memory_space<vmem>>, vector<112x128xbf16>
    %c0_2 = arith.constant 0 : index
    %c0_3 = arith.constant 0 : index
    %4 = vector.load %arg3[%c0_2, %c0_3] : memref<128x256xbf16, #tpu.memory_space<vmem>>, vector<128x256xbf16>
    %cst = arith.constant dense<0.000000e+00> : vector<112x256xf32>
    %5 = tpu.matmul %3, %4, %cst {dimension_numbers = #tpu.dot_dimension_numbers<[1], [0], [0], [1], [0, 0, 1, 1], [], []>} : vector<112x128xbf16>, vector<128x256xbf16>, vector<112x256xf32> -> vector<112x256xf32>
    %c0_4 = arith.constant 0 : index
    %c0_5 = arith.constant 0 : index
    %6 = vector.load %arg4[%c0_4, %c0_5] : memref<1x256xf32, #tpu.memory_space<vmem>>, vector<1x256xf32>
    %7 = vector.broadcast %6 : vector<1x256xf32> to vector<112x256xf32>
    %8 = arith.addf %5, %7 : vector<112x256xf32>
    %cst_6 = arith.constant 5.000000e-01 : f32
    %9 = vector.broadcast %cst_6 : f32 to vector<112x256xf32>
    %10 = arith.mulf %9, %8 : vector<112x256xf32>
    %cst_7 = arith.constant 4.471500e-02 : f32
    %11 = vector.broadcast %cst_7 : f32 to vector<112x256xf32>
    %12 = arith.mulf %11, %8 : vector<112x256xf32>
    %13 = arith.mulf %12, %8 : vector<112x256xf32>
    %14 = arith.mulf %13, %8 : vector<112x256xf32>
    %15 = arith.addf %8, %14 : vector<112x256xf32>
    %cst_8 = arith.constant 0.797884583 : f32
    %16 = vector.broadcast %cst_8 : f32 to vector<112x256xf32>
    %17 = arith.mulf %16, %15 : vector<112x256xf32>
    %18 = math.tanh %17 : vector<112x256xf32>
    %cst_9 = arith.constant 1.000000e+00 : f32
    %19 = vector.broadcast %cst_9 : f32 to vector<112x256xf32>
    %20 = arith.addf %19, %18 : vector<112x256xf32>
    %21 = arith.mulf %10, %20 : vector<112x256xf32>
    %c0_10 = arith.constant 0 : index
    %c0_11 = arith.constant 0 : index
    %22 = vector.load %arg7[%c0_10, %c0_11] : memref<112x128xf32, #tpu.memory_space<vmem>>, vector<112x128xf32>
    %23 = arith.truncf %21 : vector<112x256xf32> to vector<112x256xbf16>
    %c0_12 = arith.constant 0 : index
    %c0_13 = arith.constant 0 : index
    %24 = vector.load %arg5[%c0_12, %c0_13] : memref<256x128xbf16, #tpu.memory_space<vmem>>, vector<256x128xbf16>
    %cst_14 = arith.constant dense<0.000000e+00> : vector<112x128xf32>
    %25 = tpu.matmul %23, %24, %cst_14 {dimension_numbers = #tpu.dot_dimension_numbers<[1], [0], [0], [1], [0, 0, 1, 1], [], []>} : vector<112x256xbf16>, vector<256x128xbf16>, vector<112x128xf32> -> vector<112x128xf32>
    %26 = arith.addf %22, %25 : vector<112x128xf32>
    %c0_15 = arith.constant 0 : index
    %c0_16 = arith.constant 0 : index
    %27 = vector.load %arg7[%c0_15, %c0_16] : memref<112x128xf32, #tpu.memory_space<vmem>>, vector<112x128xf32>
    tpu.vector_store %arg7[%c0_15, %c0_16], %26 {strides = array<i32>} : memref<112x128xf32, #tpu.memory_space<vmem>>, vector<112x128xf32>,
    return
  }
  func.func @transform_0(%arg0: i32, %arg1: i32) -> (i32, i32) {
    %c0_i32 = arith.constant 0 : i32
    %c0_i32_0 = arith.constant 0 : i32
    return %arg0, %c0_i32 : i32, i32
  }
  func.func @transform_1(%arg0: i32, %arg1: i32) -> (i32, i32) {
    %c0_i32 = arith.constant 0 : i32
    %c0_i32_0 = arith.constant 0 : i32
    return %c0_i32, %arg1 : i32, i32
  }
  func.func @transform_2(%arg0: i32, %arg1: i32) -> (i32, i32) {
    %c0_i32 = arith.constant 0 : i32
    %c0_i32_0 = arith.constant 0 : i32
    return %c0_i32, %arg1 : i32, i32
  }
  func.func @transform_3(%arg0: i32, %arg1: i32) -> (i32, i32) {
    %c0_i32 = arith.constant 0 : i32
    %c0_i32_0 = arith.constant 0 : i32
    return %arg1, %c0_i32 : i32, i32
  }
  func.func @transform_4(%arg0: i32, %arg1: i32) -> (i32, i32) {
    %c0_i32 = arith.constant 0 : i32
    %c0_i32_0 = arith.constant 0 : i32
    %c0_i32_1 = arith.constant 0 : i32
    return %c0_i32, %c0_i32_0 : i32, i32
  }
  func.func @transform_5(%arg0: i32, %arg1: i32) -> (i32, i32) {
    %c0_i32 = arith.constant 0 : i32
    %c0_i32_0 = arith.constant 0 : i32
    return %arg0, %c0_i32 : i32, i32
  }
}

</mosaic_0001>

<llo_original>
// kernel: mlp_forward.1
$region0: #{mlp_forward.1}
  #allocation0 [shape = 'u32[]', space=smem, size = 0x4, offset = 0x4, fixed_abs, tag = 'smem constant byte address 0x4 - core index']
  #allocation1 [shape = 'u32[72,128]{1,0:T(1,128)}', space=vmem, size = 0x9000, scoped, tag = 'internal scratch']
  %s0 = inlined_call_operand.vmem [shape: bf16[224,128], index: 0, kind: input, shape index: {}]
  %s1 = inlined_call_operand.vmem [shape: bf16[128,256], index: 1, kind: input, shape index: {}]
  %s2 = inlined_call_operand.vmem [shape: f32[1,256], index: 2, kind: input, shape index: {}]
  %s3 = inlined_call_operand.vmem [shape: bf16[256,128], index: 3, kind: input, shape index: {}]
  %s4 = inlined_call_operand.vmem [shape: f32[1,128], index: 4, kind: input, shape index: {}]
  %s5 = inlined_call_operand.vmem [shape: f32[224,128], index: 5, kind: output, shape index: {}]
  %s6 = sld [smem:[#allocation0]]
  $region57: #{mlp_forward.1} parent=0
    _
  %s8 = ssub.s32 1, %s6
  %s9 = scalar_select 0, %s8, %s6
  loop: start=0, step=1, limit=4
  $region2: #{mlp_forward.1} parent=0 // loop_pre_header
    _
  $region3: #{mlp_forward.1} parent=0 // loop_header
    %s11 = sphi 0, %s15
    %p12 = scmp.ge.s32.totalorder %s11, 4
    %s18 = sphi 0, %s30
    %s19 = sphi 0, %s26
    %s20 = sphi 0, %s18
    %s21 = sphi 0, %s19
    %s22 = sphi 0, %s20
    %s23 = sphi 0, %s21
    %s33 = sphi 0, %s35
    %s36 = sphi 0, %s33
    %s37 = sphi 0, %s36
    %s53 = sphi 0, %s37
    %s59 = sphi 0, %s61
    %s62 = sphi 0, %s59
    %s63 = sphi 0, %s62
    %s79 = sphi 0, %s63
    %s85 = sphi 0, %s87
    %s88 = sphi 0, %s85
    %s89 = sphi 0, %s88
    %s105 = sphi 0, %s89
    %s111 = sphi 0, %s113
    %s114 = sphi 0, %s111
    %s115 = sphi 0, %s114
    %s131 = sphi 0, %s115
    %s135 = sphi 0, %s135
    %s137 = sphi 0, %s135
    %s138 = sphi 0, %s137
    %s152 = sphi 0, %s138
    %s158 = sphi 0, %s160
    %s161 = sphi 0, %s158
    %s162 = sphi 0, %s161
    %s178 = sphi 0, %s162
  $region4: #{mlp_forward.1} parent=0 // loop_header_branch
    %14 = sbr.rel (%p12) target = $region8
  $region5: #{mlp_forward.1} parent=0 // loop_body
    %s16 = ssub.s32 %s11, 1
    %s17 = ssub.s32 %s11, 2
    %s24 = sadd.s32 1, %s19
    %p25 = scmp.ge.s32.totalorder %s24, 1
    %s26 = scalar_select %p25, 0, %s24
    %s27 = sadd.s32 1, %s18
    %s28 = scalar_select %p25, %s27, %s18
    %p29 = scmp.ge.s32.totalorder %s28, 2
    %s30 = scalar_select %p29, 0, %s28
    %s31 = ssub.s32 %s18, %s30
    %p32 = scmp.eq.s32.totalorder %s31, 0
    %s34 = sadd.s32 %s33, 1
    %s35 = scalar_select %p32, %s33, %s34
    %p38 = pneg %p32
    %p39 = scmp.eq.s32.totalorder %s11, 1
    %p40 = por %p38, %p39
    %p41 = scmp.ne.s32.totalorder %s33, %s36
    %p42 = scmp.eq.s32.totalorder %s11, 0
    %p43 = por %p41, %p42
    %p44 = scmp.ne.s32.totalorder %s33, %s36
    %p45 = scmp.eq.s32.totalorder %s16, 1
    %p46 = por %p44, %p45
    %p47 = scmp.ne.s32.totalorder %s36, %s37
    %p48 = scmp.eq.s32.totalorder %s16, 0
    %p49 = por %p47, %p48
    %p50 = scmp.ne.s32.totalorder %s36, %s37
    %p51 = scmp.eq.s32.totalorder %s17, 1
    %p52 = por %p50, %p51
    %p54 = scmp.ne.s32.totalorder %s37, %s53
    %p55 = scmp.eq.s32.totalorder %s17, 0
    %p56 = por %p54, %p55
    %s57 = ssub.s32 %s19, %s26
    %p58 = scmp.eq.s32.totalorder %s57, 0
    %s60 = sadd.s32 %s59, 1
    %s61 = scalar_select %p58, %s59, %s60
    %p64 = pneg %p58
    %p65 = scmp.eq.s32.totalorder %s11, 1
    %p66 = por %p64, %p65
    %p67 = scmp.ne.s32.totalorder %s59, %s62
    %p68 = scmp.eq.s32.totalorder %s11, 0
    %p69 = por %p67, %p68
    %p70 = scmp.ne.s32.totalorder %s59, %s62
    %p71 = scmp.eq.s32.totalorder %s16, 1
    %p72 = por %p70, %p71
    %p73 = scmp.ne.s32.totalorder %s62, %s63
    %p74 = scmp.eq.s32.totalorder %s16, 0
    %p75 = por %p73, %p74
    %p76 = scmp.ne.s32.totalorder %s62, %s63
    %p77 = scmp.eq.s32.totalorder %s17, 1
    %p78 = por %p76, %p77
    %p80 = scmp.ne.s32.totalorder %s63, %s79
    %p81 = scmp.eq.s32.totalorder %s17, 0
    %p82 = por %p80, %p81
    %s83 = ssub.s32 %s19, %s26
    %p84 = scmp.eq.s32.totalorder %s83, 0
    %s86 = sadd.s32 %s85, 1
    %s87 = scalar_select %p84, %s85, %s86
    %p90 = pneg %p84
    %p91 = scmp.eq.s32.totalorder %s11, 1
    %p92 = por %p90, %p91
    %p93 = scmp.ne.s32.totalorder %s85, %s88
    %p94 = scmp.eq.s32.totalorder %s11, 0
    %p95 = por %p93, %p94
    %p96 = scmp.ne.s32.totalorder %s85, %s88
    %p97 = scmp.eq.s32.totalorder %s16, 1
    %p98 = por %p96, %p97
    %p99 = scmp.ne.s32.totalorder %s88, %s89
    %p100 = scmp.eq.s32.totalorder %s16, 0
    %p101 = por %p99, %p100
    %p102 = scmp.ne.s32.totalorder %s88, %s89
    %p103 = scmp.eq.s32.totalorder %s17, 1
    %p104 = por %p102, %p103
    %p106 = scmp.ne.s32.totalorder %s89, %s105
    %p107 = scmp.eq.s32.totalorder %s17, 0
    %p108 = por %p106, %p107
    %s109 = ssub.s32 %s19, %s26
    %p110 = scmp.eq.s32.totalorder %s109, 0
    %s112 = sadd.s32 %s111, 1
    %s113 = scalar_select %p110, %s111, %s112
    %p116 = pneg %p110
    %p117 = scmp.eq.s32.totalorder %s11, 1
    %p118 = por %p116, %p117
    %p119 = scmp.ne.s32.totalorder %s111, %s114
    %p120 = scmp.eq.s32.totalorder %s11, 0
    %p121 = por %p119, %p120
    %p122 = scmp.ne.s32.totalorder %s111, %s114
    %p123 = scmp.eq.s32.totalorder %s16, 1
    %p124 = por %p122, %p123
    %p125 = scmp.ne.s32.totalorder %s114, %s115
    %p126 = scmp.eq.s32.totalorder %s16, 0
    %p127 = por %p125, %p126
    %p128 = scmp.ne.s32.totalorder %s114, %s115
    %p129 = scmp.eq.s32.totalorder %s17, 1
    %p130 = por %p128, %p129
    %p132 = scmp.ne.s32.totalorder %s115, %s131
    %p133 = scmp.eq.s32.totalorder %s17, 0
    %p134 = por %p132, %p133
    %s136 = sadd.s32 %s135, 1
    %p139 = scmp.eq.s32.totalorder %s11, 1
    %p140 = scmp.ne.s32.totalorder %s135, %s137
    %p141 = scmp.eq.s32.totalorder %s11, 0
    %p142 = por %p140, %p141
    %p143 = scmp.ne.s32.totalorder %s135, %s137
    %p144 = scmp.eq.s32.totalorder %s16, 1
    %p145 = por %p143, %p144
    %p146 = scmp.ne.s32.totalorder %s137, %s138
    %p147 = scmp.eq.s32.totalorder %s16, 0
    %p148 = por %p146, %p147
    %p149 = scmp.ne.s32.totalorder %s137, %s138
    %p150 = scmp.eq.s32.totalorder %s17, 1
    %p151 = por %p149, %p150
    %p153 = scmp.ne.s32.totalorder %s138, %s152
    %p154 = scmp.eq.s32.totalorder %s17, 0
    %p155 = por %p153, %p154
    %s156 = ssub.s32 %s18, %s30
    %p157 = scmp.eq.s32.totalorder %s156, 0
    %s159 = sadd.s32 %s158, 1
    %s160 = scalar_select %p157, %s158, %s159
    %p163 = pneg %p157
    %p164 = scmp.eq.s32.totalorder %s11, 1
    %p165 = por %p163, %p164
    %p166 = scmp.ne.s32.totalorder %s158, %s161
    %p167 = scmp.eq.s32.totalorder %s11, 0
    %p168 = por %p166, %p167
    %p169 = scmp.ne.s32.totalorder %s158, %s161
    %p170 = scmp.eq.s32.totalorder %s16, 1
    %p171 = por %p169, %p170
    %p172 = scmp.ne.s32.totalorder %s161, %s162
    %p173 = scmp.eq.s32.totalorder %s16, 0
    %p174 = por %p172, %p173
    %p175 = scmp.ne.s32.totalorder %s161, %s162
    %p176 = scmp.eq.s32.totalorder %s17, 1
    %p177 = por %p175, %p176
    %p179 = scmp.ne.s32.totalorder %s162, %s178
    %p180 = scmp.eq.s32.totalorder %s17, 0
    %p181 = por %p179, %p180
    %p182 = scmp.le.s32.totalorder 1, %s11
    %p183 = scmp.lt.s32.totalorder %s11, 3
    %p184 = pnand %p182, %p183
    %p185 = pneg %p184
    // Predicated region
    $region9: #{mlp_forward.1} parent=5 // pred_check
      _
    $region10: #{mlp_forward.1} parent=5 // pred_check_branch
      %187 = sbr.rel (%p184) target = $region12
    $region11: #{mlp_forward.1} parent=5 // pred_region
      %s188 = ssub.s32 %s11, 1
      // Predicated region
      $region13: #{mlp_forward.1} parent=11 // pred_check
        %p189 = pneg %p75
      $region14: #{mlp_forward.1} parent=11 // pred_check_branch
        %191 = sbr.rel (%p189) target = $region16
      $region15: #{mlp_forward.1} parent=11 // pred_region
        %s192 = smul.u32 2, %s21
        %p193 = scmp.lt.s32.totalorder %s192, 1
        %s194 = scalar_select %p193, %s192, 1
        %s195 = smul.addr %s194, 4
        %s196 = scalar_lea.vmem %s1, %s195
        %s197 = smul.u32 2, %s21
      $region16: #{mlp_forward.1} parent=11 // pred_fallthru
        _
      // Predicated region
      $region17: #{mlp_forward.1} parent=11 // pred_check
        %p198 = pneg %p101
      $region18: #{mlp_forward.1} parent=11 // pred_check_branch
        %200 = sbr.rel (%p198) target = $region20
      $region19: #{mlp_forward.1} parent=11 // pred_region
        %s201 = smul.u32 2, %s21
        %p202 = scmp.lt.s32.totalorder %s201, 1
        %s203 = scalar_select %p202, %s201, 1
        %s204 = scalar_lea.vmem %s2, %s203
        %s205 = smul.u32 2, %s21
      $region20: #{mlp_forward.1} parent=11 // pred_fallthru
        _
      // Predicated region
      $region21: #{mlp_forward.1} parent=11 // pred_check
        %p206 = pneg %p127
      $region22: #{mlp_forward.1} parent=11 // pred_check_branch
        %208 = sbr.rel (%p206) target = $region24
      $region23: #{mlp_forward.1} parent=11 // pred_region
        %s209 = smul.u32 32, %s21
        %p210 = scmp.lt.s32.totalorder %s209, 31
        %s211 = scalar_select %p210, %s209, 31
        %s212 = smul.addr %s211, 4
        %s213 = scalar_lea.vmem %s3, %s212
        %s214 = smul.u32 32, %s21
      $region24: #{mlp_forward.1} parent=11 // pred_fallthru
        _
      // Predicated region
      $region25: #{mlp_forward.1} parent=11 // pred_check
        %p215 = pneg %p148
      $region26: #{mlp_forward.1} parent=11 // pred_check_branch
        %217 = sbr.rel (%p215) target = $region28
      $region27: #{mlp_forward.1} parent=11 // pred_region
        _
      $region28: #{mlp_forward.1} parent=11 // pred_fallthru
        _
    $region12: #{mlp_forward.1} parent=5 // pred_fallthru
      _
    %p218 = scmp.lt.s32.totalorder %s11, 2
    // Predicated region
    $region29: #{mlp_forward.1} parent=5 // pred_check
      %p219 = pneg %p218
    $region30: #{mlp_forward.1} parent=5 // pred_check_branch
      %221 = sbr.rel (%p219) target = $region32
    $region31: #{mlp_forward.1} parent=5 // pred_region
      // Predicated region
      $region33: #{mlp_forward.1} parent=31 // pred_check
        %p222 = pneg %p43
      $region34: #{mlp_forward.1} parent=31 // pred_check_branch
        %224 = sbr.rel (%p222) target = $region36
      $region35: #{mlp_forward.1} parent=31 // pred_region
        %s225 = smul.u32 14, %s18
        %p226 = scmp.lt.s32.totalorder %s225, 27
        %s227 = scalar_select %p226, %s225, 27
        %s228 = smul.addr %s227, 4
        %s229 = scalar_lea.vmem %s0, %s228
        %s230 = smul.u32 14, %s18
      $region36: #{mlp_forward.1} parent=31 // pred_fallthru
        _
    $region32: #{mlp_forward.1} parent=5 // pred_fallthru
      _
    %p231 = scmp.le.s32.totalorder 1, %s11
    %p232 = scmp.lt.s32.totalorder %s11, 3
    %p233 = pnand %p231, %p232
    %p234 = pneg %p233
    // Predicated region
    $region37: #{mlp_forward.1} parent=5 // pred_check
      _
    $region38: #{mlp_forward.1} parent=5 // pred_check_branch
      %236 = sbr.rel (%p233) target = $region40
    $region39: #{mlp_forward.1} parent=5 // pred_region
      %s237 = ssub.s32 %s11, 1
      %s238 = smul.u32 14, %s20
      %p239 = scmp.lt.s32.totalorder %s238, 27
      %s240 = scalar_select %p239, %s238, 27
      %s241 = smul.addr %s240, 4
      %s242 = scalar_lea.vmem %s0, %s241
      %p243 = pneg %p49
      %p244 = pneg %p46
      %s245 = smul.u32 2, %s21
      %p246 = scmp.lt.s32.totalorder %s245, 1
      %s247 = scalar_select %p246, %s245, 1
      %s248 = smul.addr %s247, 4
      %s249 = scalar_lea.vmem %s1, %s248
      %p250 = pneg %p75
      %p251 = pneg %p72
      %s252 = smul.u32 2, %s21
      %p253 = scmp.lt.s32.totalorder %s252, 1
      %s254 = scalar_select %p253, %s252, 1
      %s255 = scalar_lea.vmem %s2, %s254
      %p256 = pneg %p101
      %p257 = pneg %p98
      %s258 = smul.u32 32, %s21
      %p259 = scmp.lt.s32.totalorder %s258, 31
      %s260 = scalar_select %p259, %s258, 31
      %s261 = smul.addr %s260, 4
      %s262 = scalar_lea.vmem %s3, %s261
      %p263 = pneg %p127
      %p264 = pneg %p124
      %p265 = pneg %p148
      %p266 = pneg %p145
      %p267 = pneg %p174
      %p268 = pneg %p171
      %s269 = smul.u32 14, %s20
      %p270 = scmp.lt.s32.totalorder %s269, 27
      %s271 = scalar_select %p270, %s269, 27
      %s272 = smul.addr %s271, 8
      %s273 = scalar_lea.vmem %s5, %s272
      %s274 = smul.u32 14, %s20
      %p275 = scmp.lt.s32.totalorder %s274, 27
      %s276 = scalar_select %p275, %s274, 27
      %s277 = smul.addr %s276, 4
      %s278 = scalar_lea.vmem %s0, %s277
      %s279 = smul.u32 14, %s20
      %s280 = smul.u32 2, %s21
      %p281 = scmp.lt.s32.totalorder %s280, 1
      %s282 = scalar_select %p281, %s280, 1
      %s283 = smul.addr %s282, 4
      %s284 = scalar_lea.vmem %s1, %s283
      %s285 = smul.u32 2, %s21
      %s286 = smul.u32 2, %s21
      %p287 = scmp.lt.s32.totalorder %s286, 1
      %s288 = scalar_select %p287, %s286, 1
      %s289 = scalar_lea.vmem %s2, %s288
      %s290 = smul.u32 2, %s21
      %s291 = smul.u32 32, %s21
      %p292 = scmp.lt.s32.totalorder %s291, 31
      %s293 = scalar_select %p292, %s291, 31
      %s294 = smul.addr %s293, 4
      %s295 = scalar_lea.vmem %s3, %s294
      %s296 = smul.u32 32, %s21
      %s297 = smul.u32 14, %s20
      %p298 = scmp.lt.s32.totalorder %s297, 27
      %s299 = scalar_select %p298, %s297, 27
      %s300 = smul.addr %s299, 8
      %s301 = scalar_lea.vmem %s5, %s300
      %s302 = smul.u32 14, %s20
      %p303 = scmp.eq.s32.totalorder %s21, 0
      // Predicated region
      $region41: #{mlp_forward.1} parent=39 // pred_check
        %p304 = pneg %p303
      $region42: #{mlp_forward.1} parent=39 // pred_check_branch
        %306 = sbr.rel (%p304) target = $region44
      $region43: #{mlp_forward.1} parent=39 // pred_region
        %v307 = vld [vmem:[%s4] sm:$0x1]
        %v309 = vperm.slane %v307, 0
        %311 = vst [vmem:[%s301] sm:$0xff] %v309
        %312 = vst [vmem:[%s301 + $0x8] sm:$0xff] %v309
        %313 = vst [vmem:[%s301 + $0x10] sm:$0xff] %v309
        %314 = vst [vmem:[%s301 + $0x18] sm:$0xff] %v309
        %315 = vst [vmem:[%s301 + $0x20] sm:$0xff] %v309
        %316 = vst [vmem:[%s301 + $0x28] sm:$0xff] %v309
        %317 = vst [vmem:[%s301 + $0x30] sm:$0xff] %v309
        %318 = vst [vmem:[%s301 + $0x38] sm:$0xff] %v309
        %319 = vst [vmem:[%s301 + $0x40] sm:$0xff] %v309
        %320 = vst [vmem:[%s301 + $0x48] sm:$0xff] %v309
        %321 = vst [vmem:[%s301 + $0x50] sm:$0xff] %v309
        %322 = vst [vmem:[%s301 + $0x58] sm:$0xff] %v309
        %323 = vst [vmem:[%s301 + $0x60] sm:$0xff] %v309
        %324 = vst [vmem:[%s301 + $0x68] sm:$0xff] %v309
      $region44: #{mlp_forward.1} parent=39 // pred_fallthru
        _
      %v325 = vld [vmem:[%s278] sm:$0xf]
      %v326 = vld [vmem:[%s278 + $0x4] sm:$0xf]
      %v327 = vld [vmem:[%s278 + $0x8] sm:$0xf]
      %v328 = vld [vmem:[%s278 + $0xc] sm:$0xf]
      %v329 = vld [vmem:[%s278 + $0x10] sm:$0xf]
      %v330 = vld [vmem:[%s278 + $0x14] sm:$0xf]
      %v331 = vld [vmem:[%s278 + $0x18] sm:$0xf]
      %v332 = vld [vmem:[%s278 + $0x1c] sm:$0xf]
      %v333 = vld [vmem:[%s278 + $0x20] sm:$0xf]
      %v334 = vld [vmem:[%s278 + $0x24] sm:$0xf]
      %v335 = vld [vmem:[%s278 + $0x28] sm:$0xf]
      %v336 = vld [vmem:[%s278 + $0x2c] sm:$0xf]
      %v337 = vld [vmem:[%s278 + $0x30] sm:$0xf]
      %v338 = vld [vmem:[%s278 + $0x34] sm:$0xf]
      %v339 = vld [vmem:[%s284] sm:$0xff]
      %v340 = vld [vmem:[%s284 + $0x8] sm:$0xff]
      %v341 = vld [vmem:[%s284 + $0x10] sm:$0xff]
      %v342 = vld [vmem:[%s284 + $0x18] sm:$0xff]
      %v343 = vld [vmem:[%s284 + $0x20] sm:$0xff]
      %v344 = vld [vmem:[%s284 + $0x28] sm:$0xff]
      %v345 = vld [vmem:[%s284 + $0x30] sm:$0xff]
      %v346 = vld [vmem:[%s284 + $0x38] sm:$0xff]
      %v347 = vld [vmem:[%s284 + $0x40] sm:$0xff]
      %v348 = vld [vmem:[%s284 + $0x48] sm:$0xff]
      %v349 = vld [vmem:[%s284 + $0x50] sm:$0xff]
      %v350 = vld [vmem:[%s284 + $0x58] sm:$0xff]
      %v351 = vld [vmem:[%s284 + $0x60] sm:$0xff]
      %v352 = vld [vmem:[%s284 + $0x68] sm:$0xff]
      %v353 = vld [vmem:[%s284 + $0x70] sm:$0xff]
      %v354 = vld [vmem:[%s284 + $0x78] sm:$0xff]
      %v355 = vld [vmem:[%s289] sm:$0x3]
      %v357 = vperm.slane %v355, 0
      %v358 = vperm.slane %v355, 1
      %v375 = vunpack.c.l.b16 %v325
      %v376 = vunpack.c.l.b16 %v326
      %v377 = vunpack.c.l.b16 %v327
      %v378 = vunpack.c.l.b16 %v328
      %v379 = vunpack.c.l.b16 %v329
      %v380 = vunpack.c.l.b16 %v330
      %v381 = vunpack.c.l.b16 %v331
      %v382 = vunpack.c.l.b16 %v332
      %v383 = vunpack.c.l.b16 %v333
      %v384 = vunpack.c.l.b16 %v334
      %v385 = vunpack.c.l.b16 %v335
      %v386 = vunpack.c.l.b16 %v336
      %v387 = vunpack.c.l.b16 %v337
      %v388 = vunpack.c.l.b16 %v338
      %v389 = vpack.c.b16 %v376, %v375
      %v390 = vpack.c.b16 %v378, %v377
      %v391 = vpack.c.b16 %v380, %v379
      %v392 = vpack.c.b16 %v382, %v381
      %v393 = vpack.c.b16 %v384, %v383
      %v394 = vpack.c.b16 %v386, %v385
      %v395 = vpack.c.b16 %v388, %v387
      %v419 = vunpack.c.l.b16 %v339
      %v420 = vunpack.c.h.b16 %v339
      %v421 = vunpack.c.l.b16 %v340
      %v422 = vunpack.c.h.b16 %v340
      %v423 = vunpack.c.l.b16 %v341
      %v424 = vunpack.c.h.b16 %v341
      %v425 = vunpack.c.l.b16 %v342
      %v426 = vunpack.c.h.b16 %v342
      %v427 = vunpack.c.l.b16 %v343
      %v428 = vunpack.c.h.b16 %v343
      %v429 = vunpack.c.l.b16 %v344
      %v430 = vunpack.c.h.b16 %v344
      %v431 = vunpack.c.l.b16 %v345
      %v432 = vunpack.c.h.b16 %v345
      %v433 = vunpack.c.l.b16 %v346
      %v434 = vunpack.c.h.b16 %v346
      %v435 = vunpack.c.l.b16 %v347
      %v436 = vunpack.c.h.b16 %v347
      %v437 = vunpack.c.l.b16 %v348
      %v438 = vunpack.c.h.b16 %v348
      %v439 = vunpack.c.l.b16 %v349
      %v440 = vunpack.c.h.b16 %v349
      %v441 = vunpack.c.l.b16 %v350
      %v442 = vunpack.c.h.b16 %v350
      %v443 = vunpack.c.l.b16 %v351
      %v444 = vunpack.c.h.b16 %v351
      %v445 = vunpack.c.l.b16 %v352
      %v446 = vunpack.c.h.b16 %v352
      %v447 = vunpack.c.l.b16 %v353
      %v448 = vunpack.c.h.b16 %v353
      %v449 = vunpack.c.l.b16 %v354
      %v450 = vunpack.c.h.b16 %v354
      %v451 = vpack.c.b16 %v421, %v419
      %v452 = vpack.c.b16 %v422, %v420
      %v453 = vpack.c.b16 %v425, %v423
      %v454 = vpack.c.b16 %v426, %v424
      %v455 = vpack.c.b16 %v429, %v427
      %v456 = vpack.c.b16 %v430, %v428
      %v457 = vpack.c.b16 %v433, %v431
      %v458 = vpack.c.b16 %v434, %v432
      %v459 = vpack.c.b16 %v437, %v435
      %v460 = vpack.c.b16 %v438, %v436
      %v461 = vpack.c.b16 %v441, %v439
      %v462 = vpack.c.b16 %v442, %v440
      %v463 = vpack.c.b16 %v445, %v443
      %v464 = vpack.c.b16 %v446, %v444
      %v465 = vpack.c.b16 %v449, %v447
      %v466 = vpack.c.b16 %v450, %v448
      %483 = vmatpush.bf16.msra.mxu0 %v465
      %484 = vmatpush.bf16.msra.mxu0 %v463
      %485 = vmatpush.bf16.msra.mxu0 %v461
      %486 = vmatpush.bf16.msra.mxu0 %v459
      %487 = vmatpush.bf16.msra.mxu0 %v457
      %488 = vmatpush.bf16.msra.mxu0 %v455
      %489 = vmatpush.bf16.msra.mxu0 %v453
      %490 = vmatpush.bf16.msra.mxu0 %v451
      %491 = vmatmul.bf16.gmra.mxu0 %v389
      %v492 = vpop.f32.mrf.mxu0
      %v493 = vadd.f32 %v357, %v492
      %v494 = vpop.f32.mrf.mxu0
      %v495 = vadd.f32 %v357, %v494
      %496 = vmatmul.bf16.gmra.mxu0 %v390
      %v497 = vpop.f32.mrf.mxu0
      %v498 = vadd.f32 %v357, %v497
      %v499 = vpop.f32.mrf.mxu0
      %v500 = vadd.f32 %v357, %v499
      %501 = vmatmul.bf16.gmra.mxu0 %v391
      %v502 = vpop.f32.mrf.mxu0
      %v503 = vadd.f32 %v357, %v502
      %v504 = vpop.f32.mrf.mxu0
      %v505 = vadd.f32 %v357, %v504
      %506 = vmatmul.bf16.gmra.mxu0 %v392
      %v507 = vpop.f32.mrf.mxu0
      %v508 = vadd.f32 %v357, %v507
      %v509 = vpop.f32.mrf.mxu0
      %v510 = vadd.f32 %v357, %v509
      %511 = vmatmul.bf16.gmra.mxu0 %v393
      %v512 = vpop.f32.mrf.mxu0
      %v513 = vadd.f32 %v357, %v512
      %v514 = vpop.f32.mrf.mxu0
      %v515 = vadd.f32 %v357, %v514
      %516 = vmatmul.bf16.gmra.mxu0 %v394
      %v517 = vpop.f32.mrf.mxu0
      %v518 = vadd.f32 %v357, %v517
      %v519 = vpop.f32.mrf.mxu0
      %v520 = vadd.f32 %v357, %v519
      %521 = vmatmul.bf16.gmra.mxu0 %v395
      %v522 = vpop.f32.mrf.mxu0
      %v523 = vadd.f32 %v357, %v522
      %v524 = vpop.f32.mrf.mxu0
      %v525 = vadd.f32 %v357, %v524
      %526 = vdwg.mxu0
      %527 = vmatpush.bf16.msra.mxu0 %v466
      %528 = vmatpush.bf16.msra.mxu0 %v464
      %529 = vmatpush.bf16.msra.mxu0 %v462
      %530 = vmatpush.bf16.msra.mxu0 %v460
      %531 = vmatpush.bf16.msra.mxu0 %v458
      %532 = vmatpush.bf16.msra.mxu0 %v456
      %533 = vmatpush.bf16.msra.mxu0 %v454
      %534 = vmatpush.bf16.msra.mxu0 %v452
      %535 = vmatmul.bf16.gmra.mxu0 %v389
      %v536 = vpop.f32.mrf.mxu0
      %v537 = vadd.f32 %v358, %v536
      %v538 = vpop.f32.mrf.mxu0
      %v539 = vadd.f32 %v358, %v538
      %540 = vmatmul.bf16.gmra.mxu0 %v390
      %v541 = vpop.f32.mrf.mxu0
      %v542 = vadd.f32 %v358, %v541
      %v543 = vpop.f32.mrf.mxu0
      %v544 = vadd.f32 %v358, %v543
      %545 = vmatmul.bf16.gmra.mxu0 %v391
      %v546 = vpop.f32.mrf.mxu0
      %v547 = vadd.f32 %v358, %v546
      %v548 = vpop.f32.mrf.mxu0
      %v549 = vadd.f32 %v358, %v548
      %550 = vmatmul.bf16.gmra.mxu0 %v392
      %v551 = vpop.f32.mrf.mxu0
      %v552 = vadd.f32 %v358, %v551
      %v553 = vpop.f32.mrf.mxu0
      %v554 = vadd.f32 %v358, %v553
      %555 = vmatmul.bf16.gmra.mxu0 %v393
      %v556 = vpop.f32.mrf.mxu0
      %v557 = vadd.f32 %v358, %v556
      %v558 = vpop.f32.mrf.mxu0
      %v559 = vadd.f32 %v358, %v558
      %560 = vmatmul.bf16.gmra.mxu0 %v394
      %v561 = vpop.f32.mrf.mxu0
      %v562 = vadd.f32 %v358, %v561
      %v563 = vpop.f32.mrf.mxu0
      %v564 = vadd.f32 %v358, %v563
      %565 = vmatmul.bf16.gmra.mxu0 %v395
      %v566 = vpop.f32.mrf.mxu0
      %v567 = vadd.f32 %v358, %v566
      %v568 = vpop.f32.mrf.mxu0
      %v569 = vadd.f32 %v358, %v568
      %570 = vdwg.mxu0
      %v571 = vmul.f32 %v493, 0.5
      %v572 = vmul.f32 %v537, 0.5
      %v573 = vmul.f32 %v495, 0.5
      %v574 = vmul.f32 %v539, 0.5
      %v575 = vmul.f32 %v498, 0.5
      %v576 = vmul.f32 %v542, 0.5
      %v577 = vmul.f32 %v500, 0.5
      %v578 = vmul.f32 %v544, 0.5
      %v579 = vmul.f32 %v503, 0.5
      %v580 = vmul.f32 %v547, 0.5
      %v581 = vmul.f32 %v505, 0.5
      %v582 = vmul.f32 %v549, 0.5
      %v583 = vmul.f32 %v508, 0.5
      %v584 = vmul.f32 %v552, 0.5
      %v585 = vmul.f32 %v510, 0.5
      %v586 = vmul.f32 %v554, 0.5
      %v587 = vmul.f32 %v513, 0.5
      %v588 = vmul.f32 %v557, 0.5
      %v589 = vmul.f32 %v515, 0.5
      %v590 = vmul.f32 %v559, 0.5
      %v591 = vmul.f32 %v518, 0.5
      %v592 = vmul.f32 %v562, 0.5
      %v593 = vmul.f32 %v520, 0.5
      %v594 = vmul.f32 %v564, 0.5
      %v595 = vmul.f32 %v523, 0.5
      %v596 = vmul.f32 %v567, 0.5
      %v597 = vmul.f32 %v525, 0.5
      %v598 = vmul.f32 %v569, 0.5
      %v599 = vmul.f32 %v493, 0.044715
      %v600 = vmul.f32 %v537, 0.044715
      %v601 = vmul.f32 %v495, 0.044715
      %v602 = vmul.f32 %v539, 0.044715
      %v603 = vmul.f32 %v498, 0.044715
      %v604 = vmul.f32 %v542, 0.044715
      %v605 = vmul.f32 %v500, 0.044715
      %v606 = vmul.f32 %v544, 0.044715
      %v607 = vmul.f32 %v503, 0.044715
      %v608 = vmul.f32 %v547, 0.044715
      %v609 = vmul.f32 %v505, 0.044715
      %v610 = vmul.f32 %v549, 0.044715
      %v611 = vmul.f32 %v508, 0.044715
      %v612 = vmul.f32 %v552, 0.044715
      %v613 = vmul.f32 %v510, 0.044715
      %v614 = vmul.f32 %v554, 0.044715
      %v615 = vmul.f32 %v513, 0.044715
      %v616 = vmul.f32 %v557, 0.044715
      %v617 = vmul.f32 %v515, 0.044715
      %v618 = vmul.f32 %v559, 0.044715
      %v619 = vmul.f32 %v518, 0.044715
      %v620 = vmul.f32 %v562, 0.044715
      %v621 = vmul.f32 %v520, 0.044715
      %v622 = vmul.f32 %v564, 0.044715
      %v623 = vmul.f32 %v523, 0.044715
      %v624 = vmul.f32 %v567, 0.044715
      %v625 = vmul.f32 %v525, 0.044715
      %v626 = vmul.f32 %v569, 0.044715
      %v627 = vmul.f32 %v599, %v493
      %v628 = vmul.f32 %v600, %v537
      %v629 = vmul.f32 %v601, %v495
      %v630 = vmul.f32 %v602, %v539
      %v631 = vmul.f32 %v603, %v498
      %v632 = vmul.f32 %v604, %v542
      %v633 = vmul.f32 %v605, %v500
      %v634 = vmul.f32 %v606, %v544
      %v635 = vmul.f32 %v607, %v503
      %v636 = vmul.f32 %v608, %v547
      %v637 = vmul.f32 %v609, %v505
      %v638 = vmul.f32 %v610, %v549
      %v639 = vmul.f32 %v611, %v508
      %v640 = vmul.f32 %v612, %v552
      %v641 = vmul.f32 %v613, %v510
      %v642 = vmul.f32 %v614, %v554
      %v643 = vmul.f32 %v615, %v513
      %v644 = vmul.f32 %v616, %v557
      %v645 = vmul.f32 %v617, %v515
      %v646 = vmul.f32 %v618, %v559
      %v647 = vmul.f32 %v619, %v518
      %v648 = vmul.f32 %v620, %v562
      %v649 = vmul.f32 %v621, %v520
      %v650 = vmul.f32 %v622, %v564
      %v651 = vmul.f32 %v623, %v523
      %v652 = vmul.f32 %v624, %v567
      %v653 = vmul.f32 %v625, %v525
      %v654 = vmul.f32 %v626, %v569
      %v655 = vmul.f32 %v627, %v493
      %v656 = vmul.f32 %v628, %v537
      %v657 = vmul.f32 %v629, %v495
      %v658 = vmul.f32 %v630, %v539
      %v659 = vmul.f32 %v631, %v498
      %v660 = vmul.f32 %v632, %v542
      %v661 = vmul.f32 %v633, %v500
      %v662 = vmul.f32 %v634, %v544
      %v663 = vmul.f32 %v635, %v503
      %v664 = vmul.f32 %v636, %v547
      %v665 = vmul.f32 %v637, %v505
      %v666 = vmul.f32 %v638, %v549
      %v667 = vmul.f32 %v639, %v508
      %v668 = vmul.f32 %v640, %v552
      %v669 = vmul.f32 %v641, %v510
      %v670 = vmul.f32 %v642, %v554
      %v671 = vmul.f32 %v643, %v513
      %v672 = vmul.f32 %v644, %v557
      %v673 = vmul.f32 %v645, %v515
      %v674 = vmul.f32 %v646, %v559
      %v675 = vmul.f32 %v647, %v518
      %v676 = vmul.f32 %v648, %v562
      %v677 = vmul.f32 %v649, %v520
      %v678 = vmul.f32 %v650, %v564
      %v679 = vmul.f32 %v651, %v523
      %v680 = vmul.f32 %v652, %v567
      %v681 = vmul.f32 %v653, %v525
      %v682 = vmul.f32 %v654, %v569
      %v683 = vadd.f32 %v493, %v655
      %v684 = vadd.f32 %v537, %v656
      %v685 = vadd.f32 %v495, %v657
      %v686 = vadd.f32 %v539, %v658
      %v687 = vadd.f32 %v498, %v659
      %v688 = vadd.f32 %v542, %v660
      %v689 = vadd.f32 %v500, %v661
      %v690 = vadd.f32 %v544, %v662
      %v691 = vadd.f32 %v503, %v663
      %v692 = vadd.f32 %v547, %v664
      %v693 = vadd.f32 %v505, %v665
      %v694 = vadd.f32 %v549, %v666
      %v695 = vadd.f32 %v508, %v667
      %v696 = vadd.f32 %v552, %v668
      %v697 = vadd.f32 %v510, %v669
      %v698 = vadd.f32 %v554, %v670
      %v699 = vadd.f32 %v513, %v671
      %v700 = vadd.f32 %v557, %v672
      %v701 = vadd.f32 %v515, %v673
      %v702 = vadd.f32 %v559, %v674
      %v703 = vadd.f32 %v518, %v675
      %v704 = vadd.f32 %v562, %v676
      %v705 = vadd.f32 %v520, %v677
      %v706 = vadd.f32 %v564, %v678
      %v707 = vadd.f32 %v523, %v679
      %v708 = vadd.f32 %v567, %v680
      %v709 = vadd.f32 %v525, %v681
      %v710 = vadd.f32 %v569, %v682
      %v711 = vmul.f32 %v683, 0.7978846
      %v712 = vmul.f32 %v684, 0.7978846
      %v713 = vmul.f32 %v685, 0.7978846
      %v714 = vmul.f32 %v686, 0.7978846
      %v715 = vmul.f32 %v687, 0.7978846
      %v716 = vmul.f32 %v688, 0.7978846
      %v717 = vmul.f32 %v689, 0.7978846
      %v718 = vmul.f32 %v690, 0.7978846
      %v719 = vmul.f32 %v691, 0.7978846
      %v720 = vmul.f32 %v692, 0.7978846
      %v721 = vmul.f32 %v693, 0.7978846
      %v722 = vmul.f32 %v694, 0.7978846
      %v723 = vmul.f32 %v695, 0.7978846
      %v724 = vmul.f32 %v696, 0.7978846
      %v725 = vmul.f32 %v697, 0.7978846
      %v726 = vmul.f32 %v698, 0.7978846
      %v727 = vmul.f32 %v699, 0.7978846
      %v728 = vmul.f32 %v700, 0.7978846
      %v729 = vmul.f32 %v701, 0.7978846
      %v730 = vmul.f32 %v702, 0.7978846
      %v731 = vmul.f32 %v703, 0.7978846
      %v732 = vmul.f32 %v704, 0.7978846
      %v733 = vmul.f32 %v705, 0.7978846
      %v734 = vmul.f32 %v706, 0.7978846
      %v735 = vmul.f32 %v707, 0.7978846
      %v736 = vmul.f32 %v708, 0.7978846
      %v737 = vmul.f32 %v709, 0.7978846
      %v738 = vmul.f32 %v710, 0.7978846
      %v739 = vtanh.pop %v711
      %v740 = vtanh.pop %v712
      %v741 = vtanh.pop %v713
      %v742 = vtanh.pop %v714
      %v743 = vtanh.pop %v715
      %v744 = vtanh.pop %v716
      %v745 = vtanh.pop %v717
      %v746 = vtanh.pop %v718
      %v747 = vtanh.pop %v719
      %v748 = vtanh.pop %v720
      %v749 = vtanh.pop %v721
      %v750 = vtanh.pop %v722
      %v751 = vtanh.pop %v723
      %v752 = vtanh.pop %v724
      %v753 = vtanh.pop %v725
      %v754 = vtanh.pop %v726
      %v755 = vtanh.pop %v727
      %v756 = vtanh.pop %v728
      %v757 = vtanh.pop %v729
      %v758 = vtanh.pop %v730
      %v759 = vtanh.pop %v731
      %v760 = vtanh.pop %v732
      %v761 = vtanh.pop %v733
      %v762 = vtanh.pop %v734
      %v763 = vtanh.pop %v735
      %v764 = vtanh.pop %v736
      %v765 = vtanh.pop %v737
      %v766 = vtanh.pop %v738
      %v767 = vadd.f32 %v739, 1.0
      %v768 = vadd.f32 %v740, 1.0
      %v769 = vadd.f32 %v741, 1.0
      %v770 = vadd.f32 %v742, 1.0
      %v771 = vadd.f32 %v743, 1.0
      %v772 = vadd.f32 %v744, 1.0
      %v773 = vadd.f32 %v745, 1.0
      %v774 = vadd.f32 %v746, 1.0
      %v775 = vadd.f32 %v747, 1.0
      %v776 = vadd.f32 %v748, 1.0
      %v777 = vadd.f32 %v749, 1.0
      %v778 = vadd.f32 %v750, 1.0
      %v779 = vadd.f32 %v751, 1.0
      %v780 = vadd.f32 %v752, 1.0
      %v781 = vadd.f32 %v753, 1.0
      %v782 = vadd.f32 %v754, 1.0
      %v783 = vadd.f32 %v755, 1.0
      %v784 = vadd.f32 %v756, 1.0
      %v785 = vadd.f32 %v757, 1.0
      %v786 = vadd.f32 %v758, 1.0
      %v787 = vadd.f32 %v759, 1.0
      %v788 = vadd.f32 %v760, 1.0
      %v789 = vadd.f32 %v761, 1.0
      %v790 = vadd.f32 %v762, 1.0
      %v791 = vadd.f32 %v763, 1.0
      %v792 = vadd.f32 %v764, 1.0
      %v793 = vadd.f32 %v765, 1.0
      %v794 = vadd.f32 %v766, 1.0
      %v795 = vmul.f32 %v571, %v767
      %v796 = vmul.f32 %v572, %v768
      %v797 = vmul.f32 %v573, %v769
      %v798 = vmul.f32 %v574, %v770
      %v799 = vmul.f32 %v575, %v771
      %v800 = vmul.f32 %v576, %v772
      %v801 = vmul.f32 %v577, %v773
      %v802 = vmul.f32 %v578, %v774
      %v803 = vmul.f32 %v579, %v775
      %v804 = vmul.f32 %v580, %v776
      %v805 = vmul.f32 %v581, %v777
      %v806 = vmul.f32 %v582, %v778
      %v807 = vmul.f32 %v583, %v779
      %v808 = vmul.f32 %v584, %v780
      %v809 = vmul.f32 %v585, %v781
      %v810 = vmul.f32 %v586, %v782
      %v811 = vmul.f32 %v587, %v783
      %v812 = vmul.f32 %v588, %v784
      %v813 = vmul.f32 %v589, %v785
      %v814 = vmul.f32 %v590, %v786
      %v815 = vmul.f32 %v591, %v787
      %v816 = vmul.f32 %v592, %v788
      %v817 = vmul.f32 %v593, %v789
      %v818 = vmul.f32 %v594, %v790
      %v819 = vmul.f32 %v595, %v791
      %v820 = vmul.f32 %v596, %v792
      %v821 = vmul.f32 %v597, %v793
      %v822 = vmul.f32 %v598, %v794
      %v823 = vld [vmem:[%s301] sm:$0xff]
      %v824 = vld [vmem:[%s301 + $0x8] sm:$0xff]
      %v825 = vld [vmem:[%s301 + $0x10] sm:$0xff]
      %v826 = vld [vmem:[%s301 + $0x18] sm:$0xff]
      %v827 = vld [vmem:[%s301 + $0x20] sm:$0xff]
      %v828 = vld [vmem:[%s301 + $0x28] sm:$0xff]
      %v829 = vld [vmem:[%s301 + $0x30] sm:$0xff]
      %v830 = vld [vmem:[%s301 + $0x38] sm:$0xff]
      %v831 = vld [vmem:[%s301 + $0x40] sm:$0xff]
      %v832 = vld [vmem:[%s301 + $0x48] sm:$0xff]
      %v833 = vld [vmem:[%s301 + $0x50] sm:$0xff]
      %v834 = vld [vmem:[%s301 + $0x58] sm:$0xff]
      %v835 = vld [vmem:[%s301 + $0x60] sm:$0xff]
      %v836 = vld [vmem:[%s301 + $0x68] sm:$0xff]
      %v837 = vpack.c.bf16 %v797, %v795
      %v838 = vpack.c.bf16 %v798, %v796
      %v839 = vpack.c.bf16 %v801, %v799
      %v840 = vpack.c.bf16 %v802, %v800
      %v841 = vpack.c.bf16 %v805, %v803
      %v842 = vpack.c.bf16 %v806, %v804
      %v843 = vpack.c.bf16 %v809, %v807
      %v844 = vpack.c.bf16 %v810, %v808
      %v845 = vpack.c.bf16 %v813, %v811
      %v846 = vpack.c.bf16 %v814, %v812
      %v847 = vpack.c.bf16 %v817, %v815
      %v848 = vpack.c.bf16 %v818, %v816
      %v849 = vpack.c.bf16 %v821, %v819
      %v850 = vpack.c.bf16 %v822, %v820
      %v851 = vld [vmem:[%s295] sm:$0xf]
      %v852 = vld [vmem:[%s295 + $0x4] sm:$0xf]
      %v853 = vld [vmem:[%s295 + $0x8] sm:$0xf]
      %v854 = vld [vmem:[%s295 + $0xc] sm:$0xf]
      %v855 = vld [vmem:[%s295 + $0x10] sm:$0xf]
      %v856 = vld [vmem:[%s295 + $0x14] sm:$0xf]
      %v857 = vld [vmem:[%s295 + $0x18] sm:$0xf]
      %v858 = vld [vmem:[%s295 + $0x1c] sm:$0xf]
      %v859 = vld [vmem:[%s295 + $0x20] sm:$0xf]
      %v860 = vld [vmem:[%s295 + $0x24] sm:$0xf]
      %v861 = vld [vmem:[%s295 + $0x28] sm:$0xf]
      %v862 = vld [vmem:[%s295 + $0x2c] sm:$0xf]
      %v863 = vld [vmem:[%s295 + $0x30] sm:$0xf]
      %v864 = vld [vmem:[%s295 + $0x34] sm:$0xf]
      %v865 = vld [vmem:[%s295 + $0x38] sm:$0xf]
      %v866 = vld [vmem:[%s295 + $0x3c] sm:$0xf]
      %v867 = vld [vmem:[%s295 + $0x40] sm:$0xf]
      %v868 = vld [vmem:[%s295 + $0x44] sm:$0xf]
      %v869 = vld [vmem:[%s295 + $0x48] sm:$0xf]
      %v870 = vld [vmem:[%s295 + $0x4c] sm:$0xf]
      %v871 = vld [vmem:[%s295 + $0x50] sm:$0xf]
      %v872 = vld [vmem:[%s295 + $0x54] sm:$0xf]
      %v873 = vld [vmem:[%s295 + $0x58] sm:$0xf]
      %v874 = vld [vmem:[%s295 + $0x5c] sm:$0xf]
      %v875 = vld [vmem:[%s295 + $0x60] sm:$0xf]
      %v876 = vld [vmem:[%s295 + $0x64] sm:$0xf]
      %v877 = vld [vmem:[%s295 + $0x68] sm:$0xf]
      %v878 = vld [vmem:[%s295 + $0x6c] sm:$0xf]
      %v879 = vld [vmem:[%s295 + $0x70] sm:$0xf]
      %v880 = vld [vmem:[%s295 + $0x74] sm:$0xf]
      %v881 = vld [vmem:[%s295 + $0x78] sm:$0xf]
      %v882 = vld [vmem:[%s295 + $0x7c] sm:$0xf]
      %v915 = vunpack.c.l.b16 %v851
      %v916 = vunpack.c.l.b16 %v852
      %v917 = vunpack.c.l.b16 %v853
      %v918 = vunpack.c.l.b16 %v854
      %v919 = vunpack.c.l.b16 %v855
      %v920 = vunpack.c.l.b16 %v856
      %v921 = vunpack.c.l.b16 %v857
      %v922 = vunpack.c.l.b16 %v858
      %v923 = vunpack.c.l.b16 %v859
      %v924 = vunpack.c.l.b16 %v860
      %v925 = vunpack.c.l.b16 %v861
      %v926 = vunpack.c.l.b16 %v862
      %v927 = vunpack.c.l.b16 %v863
      %v928 = vunpack.c.l.b16 %v864
      %v929 = vunpack.c.l.b16 %v865
      %v930 = vunpack.c.l.b16 %v866
      %v931 = vunpack.c.l.b16 %v867
      %v932 = vunpack.c.l.b16 %v868
      %v933 = vunpack.c.l.b16 %v869
      %v934 = vunpack.c.l.b16 %v870
      %v935 = vunpack.c.l.b16 %v871
      %v936 = vunpack.c.l.b16 %v872
      %v937 = vunpack.c.l.b16 %v873
      %v938 = vunpack.c.l.b16 %v874
      %v939 = vunpack.c.l.b16 %v875
      %v940 = vunpack.c.l.b16 %v876
      %v941 = vunpack.c.l.b16 %v877
      %v942 = vunpack.c.l.b16 %v878
      %v943 = vunpack.c.l.b16 %v879
      %v944 = vunpack.c.l.b16 %v880
      %v945 = vunpack.c.l.b16 %v881
      %v946 = vunpack.c.l.b16 %v882
      %v947 = vpack.c.b16 %v916, %v915
      %v948 = vpack.c.b16 %v918, %v917
      %v949 = vpack.c.b16 %v920, %v919
      %v950 = vpack.c.b16 %v922, %v921
      %v951 = vpack.c.b16 %v924, %v923
      %v952 = vpack.c.b16 %v926, %v925
      %v953 = vpack.c.b16 %v928, %v927
      %v954 = vpack.c.b16 %v930, %v929
      %v955 = vpack.c.b16 %v932, %v931
      %v956 = vpack.c.b16 %v934, %v933
      %v957 = vpack.c.b16 %v936, %v935
      %v958 = vpack.c.b16 %v938, %v937
      %v959 = vpack.c.b16 %v940, %v939
      %v960 = vpack.c.b16 %v942, %v941
      %v961 = vpack.c.b16 %v944, %v943
      %v962 = vpack.c.b16 %v946, %v945
      %979 = vmatpush.bf16.msra.mxu0 %v954
      %980 = vmatpush.bf16.msra.mxu0 %v953
      %981 = vmatpush.bf16.msra.mxu0 %v952
      %982 = vmatpush.bf16.msra.mxu0 %v951
      %983 = vmatpush.bf16.msra.mxu0 %v950
      %984 = vmatpush.bf16.msra.mxu0 %v949
      %985 = vmatpush.bf16.msra.mxu0 %v948
      %986 = vmatpush.bf16.msra.mxu0 %v947
      %987 = vmatmul.bf16.gmra.mxu0 %v837
      %v988 = vpop.f32.mrf.mxu0
      %v989 = vadd.f32 0.0, %v988
      %v990 = vpop.f32.mrf.mxu0
      %v991 = vadd.f32 0.0, %v990
      %992 = vmatmul.bf16.gmra.mxu0 %v839
      %v993 = vpop.f32.mrf.mxu0
      %v994 = vadd.f32 0.0, %v993
      %v995 = vpop.f32.mrf.mxu0
      %v996 = vadd.f32 0.0, %v995
      %997 = vmatmul.bf16.gmra.mxu0 %v841
      %v998 = vpop.f32.mrf.mxu0
      %v999 = vadd.f32 0.0, %v998
      %v1000 = vpop.f32.mrf.mxu0
      %v1001 = vadd.f32 0.0, %v1000
      %1002 = vmatmul.bf16.gmra.mxu0 %v843
      %v1003 = vpop.f32.mrf.mxu0
      %v1004 = vadd.f32 0.0, %v1003
      %v1005 = vpop.f32.mrf.mxu0
      %v1006 = vadd.f32 0.0, %v1005
      %1007 = vmatmul.bf16.gmra.mxu0 %v845
      %v1008 = vpop.f32.mrf.mxu0
      %v1009 = vadd.f32 0.0, %v1008
      %v1010 = vpop.f32.mrf.mxu0
      %v1011 = vadd.f32 0.0, %v1010
      %1012 = vmatmul.bf16.gmra.mxu0 %v847
      %v1013 = vpop.f32.mrf.mxu0
      %v1014 = vadd.f32 0.0, %v1013
      %v1015 = vpop.f32.mrf.mxu0
      %v1016 = vadd.f32 0.0, %v1015
      %1017 = vmatmul.bf16.gmra.mxu0 %v849
      %v1018 = vpop.f32.mrf.mxu0
      %v1019 = vadd.f32 0.0, %v1018
      %v1020 = vpop.f32.mrf.mxu0
      %v1021 = vadd.f32 0.0, %v1020
      %1022 = vdwg.mxu0
      %1023 = vmatpush.bf16.msra.mxu0 %v962
      %1024 = vmatpush.bf16.msra.mxu0 %v961
      %1025 = vmatpush.bf16.msra.mxu0 %v960
      %1026 = vmatpush.bf16.msra.mxu0 %v959
      %1027 = vmatpush.bf16.msra.mxu0 %v958
      %1028 = vmatpush.bf16.msra.mxu0 %v957
      %1029 = vmatpush.bf16.msra.mxu0 %v956
      %1030 = vmatpush.bf16.msra.mxu0 %v955
      %1031 = vmatmul.bf16.gmra.mxu0 %v838
      %v1032 = vpop.f32.mrf.mxu0
      %v1033 = vadd.f32 %v989, %v1032
      %v1034 = vpop.f32.mrf.mxu0
      %v1035 = vadd.f32 %v991, %v1034
      %1036 = vmatmul.bf16.gmra.mxu0 %v840
      %v1037 = vpop.f32.mrf.mxu0
      %v1038 = vadd.f32 %v994, %v1037
      %v1039 = vpop.f32.mrf.mxu0
      %v1040 = vadd.f32 %v996, %v1039
      %1041 = vmatmul.bf16.gmra.mxu0 %v842
      %v1042 = vpop.f32.mrf.mxu0
      %v1043 = vadd.f32 %v999, %v1042
      %v1044 = vpop.f32.mrf.mxu0
      %v1045 = vadd.f32 %v1001, %v1044
      %1046 = vmatmul.bf16.gmra.mxu0 %v844
      %v1047 = vpop.f32.mrf.mxu0
      %v1048 = vadd.f32 %v1004, %v1047
      %v1049 = vpop.f32.mrf.mxu0
      %v1050 = vadd.f32 %v1006, %v1049
      %1051 = vmatmul.bf16.gmra.mxu0 %v846
      %v1052 = vpop.f32.mrf.mxu0
      %v1053 = vadd.f32 %v1009, %v1052
      %v1054 = vpop.f32.mrf.mxu0
      %v1055 = vadd.f32 %v1011, %v1054
      %1056 = vmatmul.bf16.gmra.mxu0 %v848
      %v1057 = vpop.f32.mrf.mxu0
      %v1058 = vadd.f32 %v1014, %v1057
      %v1059 = vpop.f32.mrf.mxu0
      %v1060 = vadd.f32 %v1016, %v1059
      %1061 = vmatmul.bf16.gmra.mxu0 %v850
      %v1062 = vpop.f32.mrf.mxu0
      %v1063 = vadd.f32 %v1019, %v1062
      %v1064 = vpop.f32.mrf.mxu0
      %v1065 = vadd.f32 %v1021, %v1064
      %1066 = vdwg.mxu0
      %v1067 = vadd.f32 %v823, %v1033
      %v1068 = vadd.f32 %v824, %v1035
      %v1069 = vadd.f32 %v825, %v1038
      %v1070 = vadd.f32 %v826, %v1040
      %v1071 = vadd.f32 %v827, %v1043
      %v1072 = vadd.f32 %v828, %v1045
      %v1073 = vadd.f32 %v829, %v1048
      %v1074 = vadd.f32 %v830, %v1050
      %v1075 = vadd.f32 %v831, %v1053
      %v1076 = vadd.f32 %v832, %v1055
      %v1077 = vadd.f32 %v833, %v1058
      %v1078 = vadd.f32 %v834, %v1060
      %v1079 = vadd.f32 %v835, %v1063
      %v1080 = vadd.f32 %v836, %v1065
      %1081 = vst [vmem:[%s301] sm:$0xff] %v1067
      %1082 = vst [vmem:[%s301 + $0x8] sm:$0xff] %v1068
      %1083 = vst [vmem:[%s301 + $0x10] sm:$0xff] %v1069
      %1084 = vst [vmem:[%s301 + $0x18] sm:$0xff] %v1070
      %1085 = vst [vmem:[%s301 + $0x20] sm:$0xff] %v1071
      %1086 = vst [vmem:[%s301 + $0x28] sm:$0xff] %v1072
      %1087 = vst [vmem:[%s301 + $0x30] sm:$0xff] %v1073
      %1088 = vst [vmem:[%s301 + $0x38] sm:$0xff] %v1074
      %1089 = vst [vmem:[%s301 + $0x40] sm:$0xff] %v1075
      %1090 = vst [vmem:[%s301 + $0x48] sm:$0xff] %v1076
      %1091 = vst [vmem:[%s301 + $0x50] sm:$0xff] %v1077
      %1092 = vst [vmem:[%s301 + $0x58] sm:$0xff] %v1078
      %1093 = vst [vmem:[%s301 + $0x60] sm:$0xff] %v1079
      %1094 = vst [vmem:[%s301 + $0x68] sm:$0xff] %v1080
      %s1095 = smul.u32 14, %s20
      %p1096 = scmp.lt.s32.totalorder %s1095, 27
      %s1097 = scalar_select %p1096, %s1095, 27
      %s1098 = smul.addr %s1097, 8
      %s1099 = scalar_lea.vmem %s5, %s1098
      // Predicated region
      $region45: #{mlp_forward.1} parent=39 // pred_check
        %p1100 = pneg %p171
      $region46: #{mlp_forward.1} parent=39 // pred_check_branch
        %1102 = sbr.rel (%p1100) target = $region48
      $region47: #{mlp_forward.1} parent=39 // pred_region
        %s1103 = smul.u32 14, %s20
      $region48: #{mlp_forward.1} parent=39 // pred_fallthru
        _
    $region40: #{mlp_forward.1} parent=5 // pred_fallthru
      _
    %p1104 = scmp.le.s32.totalorder 2, %s11
    // Predicated region
    $region49: #{mlp_forward.1} parent=5 // pred_check
      %p1105 = pneg %p1104
    $region50: #{mlp_forward.1} parent=5 // pred_check_branch
      %1107 = sbr.rel (%p1105) target = $region52
    $region51: #{mlp_forward.1} parent=5 // pred_region
      %s1108 = ssub.s32 %s11, 2
      // Predicated region
      $region53: #{mlp_forward.1} parent=51 // pred_check
        %p1109 = pneg %p177
      $region54: #{mlp_forward.1} parent=51 // pred_check_branch
        %1111 = sbr.rel (%p1109) target = $region56
      $region55: #{mlp_forward.1} parent=51 // pred_region
        %s1112 = smul.u32 14, %s22
        %p1113 = scmp.lt.s32.totalorder %s1112, 27
        %s1114 = scalar_select %p1113, %s1112, 27
        %s1115 = smul.addr %s1114, 8
        %s1116 = scalar_lea.vmem %s5, %s1115
      $region56: #{mlp_forward.1} parent=51 // pred_fallthru
        _
    $region52: #{mlp_forward.1} parent=5 // pred_fallthru
      _
  $region6: #{mlp_forward.1} parent=0 // loop_footer
    %s15 = sadd.s32 1, %s11
  $region7: #{mlp_forward.1} parent=0 // loop_footer_branch
    %10 = sbr.rel target = $region3
  $region8: #{mlp_forward.1} parent=0 // loop_exit
    _

</llo_original>
